<compile_context>
chip_gen: v7x
topology: tpu7x:2x2x1
jax: 0.10.0
libtpu: 0.0.40
codegen_flags: <defaults>
</compile_context>

<pallas_src>
import jax
import jax.numpy as jnp
import numpy as np
from jax.experimental import pallas as pl
from jax.experimental.pallas import tpu as pltpu


def channel_attention_kernel(x_ref, w1_ref, w2_ref, o_ref):
    # x_ref block: (tb, C, H*W)  -- lane-dense spatial axis.
    xb = x_ref[...].astype(jnp.float32)                      # (tb, C, HW)
    tb, c_dim, _ = xb.shape

    # Global avg / max pool over the flattened spatial (lane) axis, computed
    # once for the whole block of tb images.
    avg = jnp.mean(xb, axis=-1, keepdims=True)               # (tb, C, 1)
    mx = jnp.max(xb, axis=-1, keepdims=True)                 # (tb, C, 1)

    w1 = w1_ref[...].astype(jnp.float32)                     # (C//r, C)
    w2 = w2_ref[...].astype(jnp.float32)                     # (C, C//r)

    # (C, 2) column selector, hoisted out of the per-image loop.
    col = jax.lax.broadcasted_iota(jnp.int32, (c_dim, 2), 1)

    # Shared MLP per image; tb is a small static int -> fully unrolled.
    for i in range(tb):
        # Stack [avg, max] into (C, 2) so the shared MLP handles both pooled
        # statistics with a single pair of tiny MXU matmuls (VPU select,
        # avoids a concatenate lowering).
        pooled = jnp.where(col == 0, avg[i], mx[i])          # (C, 2)
        h = jnp.maximum(
            jnp.dot(w1, pooled, preferred_element_type=jnp.float32),
            0.0)                                             # (C//r, 2)
        y = jnp.dot(w2, h, preferred_element_type=jnp.float32)  # (C, 2)
        ca = jax.nn.sigmoid(y[:, 0:1] + y[:, 1:2])           # (C, 1)
        o_ref[i] = ca.astype(o_ref.dtype)


def _pick_batch_tile(b, image_bytes, max_bytes=4 << 20, max_tb=8):
    """Largest divisor of b (<= max_tb) whose block stays within max_bytes."""
    best = 1
    for tb in range(1, min(b, max_tb) + 1):
        if b % tb == 0 and tb * image_bytes <= max_bytes:
            best = tb
    return best


def channel_attention_pallas(x, w1, w2):
    """x: (B, C, H, W); w1: (C//r, C); w2: (C, C//r). Returns (B, C, 1, 1)."""
    Bx, Cx, Hx, Wx = x.shape
    HW = Hx * Wx
    CHx = w1.shape[0]
    x2 = x.reshape(Bx, Cx, HW)                               # metadata-only reshape

    tb = _pick_batch_tile(Bx, Cx * HW * x.dtype.itemsize)

    out = pl.pallas_call(
        channel_attention_kernel,
        out_shape=jax.ShapeDtypeStruct((Bx, Cx, 1), x.dtype),
        grid_spec=pltpu.PrefetchScalarGridSpec(
            num_scalar_prefetch=0,
            grid=(Bx // tb,),
            in_specs=[
                pl.BlockSpec((tb, Cx, HW), lambda b: (b, 0, 0)),
                pl.BlockSpec((CHx, Cx), lambda b: (0, 0)),
                pl.BlockSpec((Cx, CHx), lambda b: (0, 0)),
            ],
            out_specs=pl.BlockSpec((tb, Cx, 1), lambda b: (b, 0, 0)),
        ),
        compiler_params=pltpu.CompilerParams(
            dimension_semantics=("parallel",)),
    )(x2, w1, w2)
    return out.reshape(Bx, Cx, 1, 1)


def channel_attention_ref(x, w1, w2):
    """Pure-JAX mirror of the PyTorch ChannelAttention.forward."""
    avg = jnp.mean(x, axis=(2, 3))                           # (B, C)
    mx = jnp.max(x, axis=(2, 3))                             # (B, C)

    def mlp(v):
        h = jnp.maximum(v @ w1.T, 0.0)
        return h @ w2.T

    return jax.nn.sigmoid(mlp(avg) + mlp(mx))[:, :, None, None]


if __name__ == "__main__":
    # Shapes consistent with the module: ratio=16 requires C >= 16.
    B, C, RATIO, H, W = 2, 32, 16, 16, 16
    CH = C // RATIO

    key = jax.random.PRNGKey(0)
    kx, k1, k2 = jax.random.split(key, 3)
    x = jax.random.normal(kx, (B, C, H, W), dtype=jnp.float32)
    # Conv2d(C, C//ratio, 1, bias=False) and Conv2d(C//ratio, C, 1, bias=False)
    w1 = jax.random.normal(k1, (CH, C), dtype=jnp.float32) * 0.2
    w2 = jax.random.normal(k2, (C, CH), dtype=jnp.float32) * 0.2

    out = jax.block_until_ready(channel_attention_pallas(x, w1, w2))
    ref = jax.block_until_ready(channel_attention_ref(x, w1, w2))
    np.testing.assert_allclose(np.asarray(out), np.asarray(ref),
                               rtol=1e-4, atol=1e-5)
    print("KERNEL_OK")
</pallas_src>

<mosaic_0001>
module attributes {stable_mosaic.version = 11 : i64} {
  func.func @channel_attention_kernel(%arg0: i32, %arg1: memref<2x32x256xf32, #tpu.memory_space<vmem>>, %arg2: memref<2x32xf32, #tpu.memory_space<vmem>>, %arg3: memref<32x2xf32, #tpu.memory_space<vmem>>, %arg4: memref<2x32x1xf32, #tpu.memory_space<vmem>>) attributes {dimension_semantics = [#tpu.dimension_semantics<parallel>], iteration_bounds = array<i64: 1>, scalar_prefetch = 0 : i64, scratch_operands = 0 : i64, tpu.core_type = #tpu.core_type<tc>, window_params = [{transform_indices = @transform_0, window_bounds = array<i64: 2, 32, 256>}, {pipeline_mode = #tpu.pipeline_mode<synchronous>, transform_indices = @transform_1, window_bounds = array<i64: 2, 32>}, {pipeline_mode = #tpu.pipeline_mode<synchronous>, transform_indices = @transform_2, window_bounds = array<i64: 32, 2>}, {transform_indices = @transform_3, window_bounds = array<i64: 2, 32, 1>}]} {
    %c0 = arith.constant 0 : index
    %c0_0 = arith.constant 0 : index
    %c0_1 = arith.constant 0 : index
    %0 = vector.load %arg1[%c0, %c0_0, %c0_1] : memref<2x32x256xf32, #tpu.memory_space<vmem>>, vector<2x32x256xf32>
    %cst = arith.constant dense<0.000000e+00> : vector<2x32xf32>
    %1 = vector.multi_reduction <add>, %0, %cst [2] : vector<2x32x256xf32> to vector<2x32xf32>
    %2 = vector.shape_cast %1 : vector<2x32xf32> to vector<2x32x1xf32>
    %cst_2 = arith.constant 2.560000e+02 : f32
    %3 = vector.broadcast %cst_2 : f32 to vector<2x32x1xf32>
    %4 = arith.divf %2, %3 : vector<2x32x1xf32>
    %cst_3 = arith.constant dense<0xFF800000> : vector<2x32xf32>
    %5 = vector.multi_reduction <maximumf>, %0, %cst_3 [2] : vector<2x32x256xf32> to vector<2x32xf32>
    %6 = vector.shape_cast %5 : vector<2x32xf32> to vector<2x32x1xf32>
    %c0_4 = arith.constant 0 : index
    %c0_5 = arith.constant 0 : index
    %7 = vector.load %arg2[%c0_4, %c0_5] : memref<2x32xf32, #tpu.memory_space<vmem>>, vector<2x32xf32>
    %c0_6 = arith.constant 0 : index
    %c0_7 = arith.constant 0 : index
    %8 = vector.load %arg3[%c0_6, %c0_7] : memref<32x2xf32, #tpu.memory_space<vmem>>, vector<32x2xf32>
    %9 = tpu.iota {dimensions = array<i32: 1>} : vector<32x2xi32>
    %c0_i32 = arith.constant 0 : i32
    %10 = vector.broadcast %c0_i32 : i32 to vector<32x2xi32>
    %11 = arith.cmpi eq, %9, %10 : vector<32x2xi32>
    %12 = vector.extract_strided_slice %4 {offsets = [0, 0, 0], sizes = [1, 32, 1], strides = [1, 1, 1]} : vector<2x32x1xf32> to vector<1x32x1xf32>
    %13 = vector.shape_cast %12 : vector<1x32x1xf32> to vector<32x1xf32>
    %14 = vector.extract_strided_slice %6 {offsets = [0, 0, 0], sizes = [1, 32, 1], strides = [1, 1, 1]} : vector<2x32x1xf32> to vector<1x32x1xf32>
    %15 = vector.shape_cast %14 : vector<1x32x1xf32> to vector<32x1xf32>
    %16 = vector.shape_cast %13 : vector<32x1xf32> to vector<32x1xf32>
    %17 = vector.broadcast %16 : vector<32x1xf32> to vector<32x2xf32>
    %18 = vector.shape_cast %15 : vector<32x1xf32> to vector<32x1xf32>
    %19 = vector.broadcast %18 : vector<32x1xf32> to vector<32x2xf32>
    %20 = arith.select %11, %17, %19 : vector<32x2xi1>, vector<32x2xf32>
    %cst_8 = arith.constant dense<0.000000e+00> : vector<2x2xf32>
    %21 = tpu.matmul %7, %20, %cst_8 {dimension_numbers = #tpu.dot_dimension_numbers<[1], [0], [0], [1], [0, 0, 1, 1], [], []>} : vector<2x32xf32>, vector<32x2xf32>, vector<2x2xf32> -> vector<2x2xf32>
    %cst_9 = arith.constant 0.000000e+00 : f32
    %22 = vector.broadcast %cst_9 : f32 to vector<2x2xf32>
    %23 = arith.maximumf %21, %22 : vector<2x2xf32>
    %cst_10 = arith.constant dense<0.000000e+00> : vector<32x2xf32>
    %24 = tpu.matmul %8, %23, %cst_10 {dimension_numbers = #tpu.dot_dimension_numbers<[1], [0], [0], [1], [0, 0, 1, 1], [], []>} : vector<32x2xf32>, vector<2x2xf32>, vector<32x2xf32> -> vector<32x2xf32>
    %25 = vector.extract_strided_slice %24 {offsets = [0, 0], sizes = [32, 1], strides = [1, 1]} : vector<32x2xf32> to vector<32x1xf32>
    %26 = vector.extract_strided_slice %24 {offsets = [0, 1], sizes = [32, 1], strides = [1, 1]} : vector<32x2xf32> to vector<32x1xf32>
    %27 = arith.addf %25, %26 : vector<32x1xf32>
    %28 = arith.negf %27 : vector<32x1xf32>
    %29 = math.exp %28 : vector<32x1xf32>
    %cst_11 = arith.constant 1.000000e+00 : f32
    %30 = vector.broadcast %cst_11 : f32 to vector<32x1xf32>
    %31 = arith.addf %30, %29 : vector<32x1xf32>
    %32 = arith.divf %30, %31 : vector<32x1xf32>
    %c0_12 = arith.constant 0 : index
    %c0_13 = arith.constant 0 : index
    %c0_14 = arith.constant 0 : index
    %33 = vector.load %arg4[%c0_12, %c0_13, %c0_14] : memref<2x32x1xf32, #tpu.memory_space<vmem>>, vector<1x32x1xf32>
    %34 = vector.shape_cast %33 : vector<1x32x1xf32> to vector<32x1xf32>
    %35 = vector.shape_cast %32 : vector<32x1xf32> to vector<1x32x1xf32>
    tpu.vector_store %arg4[%c0_12, %c0_13, %c0_14], %35 {strides = array<i32>} : memref<2x32x1xf32, #tpu.memory_space<vmem>>, vector<1x32x1xf32>,
    %c0_i32_15 = arith.constant 0 : i32
    %36 = vector.broadcast %c0_i32_15 : i32 to vector<32x2xi32>
    %37 = arith.cmpi eq, %9, %36 : vector<32x2xi32>
    %38 = vector.extract_strided_slice %4 {offsets = [1, 0, 0], sizes = [1, 32, 1], strides = [1, 1, 1]} : vector<2x32x1xf32> to vector<1x32x1xf32>
    %39 = vector.shape_cast %38 : vector<1x32x1xf32> to vector<32x1xf32>
    %40 = vector.extract_strided_slice %6 {offsets = [1, 0, 0], sizes = [1, 32, 1], strides = [1, 1, 1]} : vector<2x32x1xf32> to vector<1x32x1xf32>
    %41 = vector.shape_cast %40 : vector<1x32x1xf32> to vector<32x1xf32>
    %42 = vector.shape_cast %39 : vector<32x1xf32> to vector<32x1xf32>
    %43 = vector.broadcast %42 : vector<32x1xf32> to vector<32x2xf32>
    %44 = vector.shape_cast %41 : vector<32x1xf32> to vector<32x1xf32>
    %45 = vector.broadcast %44 : vector<32x1xf32> to vector<32x2xf32>
    %46 = arith.select %37, %43, %45 : vector<32x2xi1>, vector<32x2xf32>
    %cst_16 = arith.constant dense<0.000000e+00> : vector<2x2xf32>
    %47 = tpu.matmul %7, %46, %cst_16 {dimension_numbers = #tpu.dot_dimension_numbers<[1], [0], [0], [1], [0, 0, 1, 1], [], []>} : vector<2x32xf32>, vector<32x2xf32>, vector<2x2xf32> -> vector<2x2xf32>
    %cst_17 = arith.constant 0.000000e+00 : f32
    %48 = vector.broadcast %cst_17 : f32 to vector<2x2xf32>
    %49 = arith.maximumf %47, %48 : vector<2x2xf32>
    %cst_18 = arith.constant dense<0.000000e+00> : vector<32x2xf32>
    %50 = tpu.matmul %8, %49, %cst_18 {dimension_numbers = #tpu.dot_dimension_numbers<[1], [0], [0], [1], [0, 0, 1, 1], [], []>} : vector<32x2xf32>, vector<2x2xf32>, vector<32x2xf32> -> vector<32x2xf32>
    %51 = vector.extract_strided_slice %50 {offsets = [0, 0], sizes = [32, 1], strides = [1, 1]} : vector<32x2xf32> to vector<32x1xf32>
    %52 = vector.extract_strided_slice %50 {offsets = [0, 1], sizes = [32, 1], strides = [1, 1]} : vector<32x2xf32> to vector<32x1xf32>
    %53 = arith.addf %51, %52 : vector<32x1xf32>
    %54 = arith.negf %53 : vector<32x1xf32>
    %55 = math.exp %54 : vector<32x1xf32>
    %cst_19 = arith.constant 1.000000e+00 : f32
    %56 = vector.broadcast %cst_19 : f32 to vector<32x1xf32>
    %57 = arith.addf %56, %55 : vector<32x1xf32>
    %58 = arith.divf %56, %57 : vector<32x1xf32>
    %c1 = arith.constant 1 : index
    %c0_20 = arith.constant 0 : index
    %c0_21 = arith.constant 0 : index
    %59 = vector.load %arg4[%c1, %c0_20, %c0_21] : memref<2x32x1xf32, #tpu.memory_space<vmem>>, vector<1x32x1xf32>
    %60 = vector.shape_cast %59 : vector<1x32x1xf32> to vector<32x1xf32>
    %61 = vector.shape_cast %58 : vector<32x1xf32> to vector<1x32x1xf32>
    tpu.vector_store %arg4[%c1, %c0_20, %c0_21], %61 {strides = array<i32>} : memref<2x32x1xf32, #tpu.memory_space<vmem>>, vector<1x32x1xf32>,
    return
  }
  func.func @transform_0(%arg0: i32) -> (i32, i32, i32) {
    %c0_i32 = arith.constant 0 : i32
    %c0_i32_0 = arith.constant 0 : i32
    %c0_i32_1 = arith.constant 0 : i32
    return %arg0, %c0_i32, %c0_i32_0 : i32, i32, i32
  }
  func.func @transform_1(%arg0: i32) -> (i32, i32) {
    %c0_i32 = arith.constant 0 : i32
    %c0_i32_0 = arith.constant 0 : i32
    %c0_i32_1 = arith.constant 0 : i32
    return %c0_i32, %c0_i32_0 : i32, i32
  }
  func.func @transform_2(%arg0: i32) -> (i32, i32) {
    %c0_i32 = arith.constant 0 : i32
    %c0_i32_0 = arith.constant 0 : i32
    %c0_i32_1 = arith.constant 0 : i32
    return %c0_i32, %c0_i32_0 : i32, i32
  }
  func.func @transform_3(%arg0: i32) -> (i32, i32, i32) {
    %c0_i32 = arith.constant 0 : i32
    %c0_i32_0 = arith.constant 0 : i32
    %c0_i32_1 = arith.constant 0 : i32
    return %arg0, %c0_i32, %c0_i32_0 : i32, i32, i32
  }
}

</mosaic_0001>

<llo_original>
// kernel: tpu_custom_call.1
$region0: #{tpu_custom_call.1}
  #allocation0 [shape = 'u32[]', space=smem, size = 0x4, offset = 0x4, fixed_abs, tag = 'smem constant byte address 0x4 - core index']
  #allocation1 [shape = 'u32[144,128]{1,0:T(1,128)}', space=vmem, size = 0x12000, scoped, tag = 'internal scratch']
  %s0 = inlined_call_operand.hbm [shape: f32[2,32,256], index: 0, kind: input, shape index: {}]
  %s1 = inlined_call_operand.vmem [shape: f32[2,32], index: 1, kind: input, shape index: {}]
  %s2 = inlined_call_operand.vmem [shape: f32[32,2], index: 2, kind: input, shape index: {}]
  %s3 = inlined_call_operand.vmem [shape: f32[2,32,1], index: 3, kind: output, shape index: {}]
  %s4 = sld [smem:[#allocation0]]
  $region26: #{tpu_custom_call.1} parent=0
    _
  %s6 = ssub.s32 1, %s4
  %s7 = scalar_select 0, %s6, %s4
  $region1: #{tpu_custom_call.1} parent=0
    #allocation2 [shape = 'u8[65536]{0}', space=vmem, size = 0x10000, scoped, tag = 'input window, operand 0, single buffered']
    #allocation3 [shape = 's32[1]{0}', space=sflag, size = 0x4, scoped, tag = 'scoped memory for tpu_custom_call.1']
    %8 = vsyncpa [#allocation3], 0
    // Predicated region
    $region2: #{tpu_custom_call.1} parent=1 // pred_check
      _
    $region3: #{tpu_custom_call.1} parent=1 // pred_check_branch
      %10 = sbr.rel (0) target = $region5
    $region4: #{tpu_custom_call.1} parent=1 // pred_region
      %s12 = ssub.s32 2048, 2048
      %13 = vsyncadd [#allocation3], %s12
      %s14 = sshll.u32 [#allocation2], 4
      %s15 = int_to_ptr.vmem [resolvable:$true] %s14
      %20 = dma.hbm_to_vmem [thread:$0]  %s0, 2048, %s15, [#allocation3], 256, 256, 16
    $region5: #{tpu_custom_call.1} parent=1 // pred_fallthru
      _
    // Predicated region
    $region6: #{tpu_custom_call.1} parent=1 // pred_check
      _
    $region7: #{tpu_custom_call.1} parent=1 // pred_check_branch
      %22 = sbr.rel (0) target = $region9
    $region8: #{tpu_custom_call.1} parent=1 // pred_region
      _
    $region9: #{tpu_custom_call.1} parent=1 // pred_fallthru
      _
    // Predicated region
    $region10: #{tpu_custom_call.1} parent=1 // pred_check
      _
    $region11: #{tpu_custom_call.1} parent=1 // pred_check_branch
      %24 = sbr.rel (0) target = $region13
    $region12: #{tpu_custom_call.1} parent=1 // pred_region
      _
    $region13: #{tpu_custom_call.1} parent=1 // pred_fallthru
      _
    // Predicated region
    $region14: #{tpu_custom_call.1} parent=1 // pred_check
      _
    $region15: #{tpu_custom_call.1} parent=1 // pred_check_branch
      %26 = sbr.rel (0) target = $region17
    $region16: #{tpu_custom_call.1} parent=1 // pred_region
      %27 = dma.done [#allocation3], 2048
    $region17: #{tpu_custom_call.1} parent=1 // pred_fallthru
      _
    %v28 = vld [vmem:[#allocation2] sm:$0xff]
    %v29 = vld [vmem:[#allocation2 + $0x8] sm:$0xff]
    %v30 = vld [vmem:[#allocation2 + $0x10] sm:$0xff]
    %v31 = vld [vmem:[#allocation2 + $0x18] sm:$0xff]
    %v32 = vld [vmem:[#allocation2 + $0x20] sm:$0xff]
    %v33 = vld [vmem:[#allocation2 + $0x28] sm:$0xff]
    %v34 = vld [vmem:[#allocation2 + $0x30] sm:$0xff]
    %v35 = vld [vmem:[#allocation2 + $0x38] sm:$0xff]
    %v36 = vld [vmem:[#allocation2 + $0x40] sm:$0xff]
    %v37 = vld [vmem:[#allocation2 + $0x48] sm:$0xff]
    %v38 = vld [vmem:[#allocation2 + $0x50] sm:$0xff]
    %v39 = vld [vmem:[#allocation2 + $0x58] sm:$0xff]
    %v40 = vld [vmem:[#allocation2 + $0x60] sm:$0xff]
    %v41 = vld [vmem:[#allocation2 + $0x68] sm:$0xff]
    %v42 = vld [vmem:[#allocation2 + $0x70] sm:$0xff]
    %v43 = vld [vmem:[#allocation2 + $0x78] sm:$0xff]
    %v44 = vadd.f32 %v28, %v29
    %45 = vadd.xlane.f32.xlu0 %v44
    %v46 = vpop.xlane.xlu0 %45
    %v47 = vadd.f32 %v30, %v31
    %48 = vadd.xlane.f32.xlu0 %v47
    %v49 = vpop.xlane.xlu0 %48
    %v50 = vadd.f32 %v32, %v33
    %51 = vadd.xlane.f32.xlu0 %v50
    %v52 = vpop.xlane.xlu0 %51
    %v53 = vadd.f32 %v34, %v35
    %54 = vadd.xlane.f32.xlu0 %v53
    %v55 = vpop.xlane.xlu0 %54
    %v56 = vadd.f32 %v36, %v37
    %57 = vadd.xlane.f32.xlu0 %v56
    %v58 = vpop.xlane.xlu0 %57
    %v59 = vadd.f32 %v38, %v39
    %60 = vadd.xlane.f32.xlu0 %v59
    %v61 = vpop.xlane.xlu0 %60
    %v62 = vadd.f32 %v40, %v41
    %63 = vadd.xlane.f32.xlu0 %v62
    %v64 = vpop.xlane.xlu0 %63
    %v65 = vadd.f32 %v42, %v43
    %66 = vadd.xlane.f32.xlu0 %v65
    %v67 = vpop.xlane.xlu0 %66
    %v68 = vrcp.pop 256.0
    %v69 = vmul.f32 %v46, %v68
    %v70 = vmul.f32 %v49, %v68
    %v71 = vmul.f32 %v52, %v68
    %v72 = vmul.f32 %v55, %v68
    %v73 = vmul.f32 %v58, %v68
    %v74 = vmul.f32 %v61, %v68
    %v75 = vmul.f32 %v64, %v68
    %v76 = vmul.f32 %v67, %v68
    %v77 = vmax.f32 %v28, %v29
    %78 = vmax.xlane.f32.xlu0 %v77
    %v79 = vpop.xlane.xlu0 %78
    %v80 = vmax.f32 %v30, %v31
    %81 = vmax.xlane.f32.xlu0 %v80
    %v82 = vpop.xlane.xlu0 %81
    %v83 = vmax.f32 %v32, %v33
    %84 = vmax.xlane.f32.xlu0 %v83
    %v85 = vpop.xlane.xlu0 %84
    %v86 = vmax.f32 %v34, %v35
    %87 = vmax.xlane.f32.xlu0 %v86
    %v88 = vpop.xlane.xlu0 %87
    %v89 = vmax.f32 %v36, %v37
    %90 = vmax.xlane.f32.xlu0 %v89
    %v91 = vpop.xlane.xlu0 %90
    %v92 = vmax.f32 %v38, %v39
    %93 = vmax.xlane.f32.xlu0 %v92
    %v94 = vpop.xlane.xlu0 %93
    %v95 = vmax.f32 %v40, %v41
    %96 = vmax.xlane.f32.xlu0 %v95
    %v97 = vpop.xlane.xlu0 %96
    %v98 = vmax.f32 %v42, %v43
    %99 = vmax.xlane.f32.xlu0 %v98
    %v100 = vpop.xlane.xlu0 %99
    %v101 = vld [vmem:[%s1] sm:$0x3]
    %v102 = vld [vmem:[%s2] sm:$0xff]
    %v103 = vld [vmem:[%s2 + $0x8] sm:$0xff]
    %v104 = vld [vmem:[%s2 + $0x10] sm:$0xff]
    %v105 = vld [vmem:[%s2 + $0x18] sm:$0xff]
    %v106 = vlaneseq
    %v107 = vand.u32 %v106, 127
    %vm108 = vcmp.eq.s32.totalorder %v107, 0
    %v109 = vsel %vm108, %v69, %v79
    %v110 = vsel %vm108, %v70, %v82
    %v111 = vsel %vm108, %v71, %v85
    %v112 = vsel %vm108, %v72, %v88
    %vm113 = vcmask 261120
    %v115 = vsel %vm113, %v101, 0
    %117 = vmatprep.subr.mxu0 0.0
    %118 = vmatpush1.msra.mxu0 %v109
    %119 = vmatprep.subr.mxu0 0.0
    %120 = vmatpush1.msra.mxu0 %v110
    %121 = vmatprep.subr.mxu0 0.0
    %122 = vmatpush1.msra.mxu0 %v111
    %123 = vmatprep.subr.mxu0 0.0
    %124 = vmatpush1.msra.mxu0 %v112
    %125 = vmatprep.subr.mxu0 0.0
    %126 = vmatpush1.msra.mxu0 0.0
    %127 = vmatprep.subr.mxu0 0.0
    %128 = vmatpush1.msra.mxu0 0.0
    %129 = vmatprep.subr.mxu0 0.0
    %130 = vmatpush1.msra.mxu0 0.0
    %131 = vmatprep.subr.mxu0 0.0
    %132 = vmatpush1.msra.mxu0 0.0
    %133 = vmatprep.subr.mxu0 0.0
    %134 = vmatpush1.msra.mxu0 0.0
    %135 = vmatprep.subr.mxu0 0.0
    %136 = vmatpush1.msra.mxu0 0.0
    %137 = vmatprep.subr.mxu0 0.0
    %138 = vmatpush1.msra.mxu0 0.0
    %139 = vmatprep.subr.mxu0 0.0
    %140 = vmatpush1.msra.mxu0 0.0
    %141 = vmatprep.subr.mxu0 0.0
    %142 = vmatpush1.msra.mxu0 0.0
    %143 = vmatprep.subr.mxu0 0.0
    %144 = vmatpush1.msra.mxu0 0.0
    %145 = vmatprep.subr.mxu0 0.0
    %146 = vmatpush1.msra.mxu0 0.0
    %147 = vmatprep.subr.mxu0 0.0
    %148 = vmatpush1.msra.mxu0 0.0
    %149 = vmatprep.subr.mxu0 0.0
    %150 = vmatpush1.msra.mxu0 0.0
    %151 = vmatprep.subr.mxu0 0.0
    %152 = vmatpush1.msra.mxu0 0.0
    %153 = vmatprep.subr.mxu0 0.0
    %154 = vmatpush1.msra.mxu0 0.0
    %155 = vmatprep.subr.mxu0 0.0
    %156 = vmatpush1.msra.mxu0 0.0
    %157 = vmatprep.subr.mxu0 0.0
    %158 = vmatpush1.msra.mxu0 0.0
    %159 = vmatprep.subr.mxu0 0.0
    %160 = vmatpush1.msra.mxu0 0.0
    %161 = vmatprep.subr.mxu0 0.0
    %162 = vmatpush1.msra.mxu0 0.0
    %163 = vmatprep.subr.mxu0 0.0
    %164 = vmatpush1.msra.mxu0 0.0
    %165 = vmatprep.subr.mxu0 0.0
    %166 = vmatpush1.msra.mxu0 0.0
    %167 = vmatprep.subr.mxu0 0.0
    %168 = vmatpush1.msra.mxu0 0.0
    %169 = vmatprep.subr.mxu0 0.0
    %170 = vmatpush1.msra.mxu0 0.0
    %171 = vmatprep.subr.mxu0 0.0
    %172 = vmatpush1.msra.mxu0 0.0
    %173 = vmatprep.subr.mxu0 0.0
    %174 = vmatpush1.msra.mxu0 0.0
    %175 = vmatprep.subr.mxu0 0.0
    %176 = vmatpush1.msra.mxu0 0.0
    %177 = vmatprep.subr.mxu0 0.0
    %178 = vmatpush1.msra.mxu0 0.0
    %179 = vmatprep.subr.mxu0 0.0
    %180 = vmatpush1.msra.mxu0 0.0
    %181 = vmatprep.mubr.f32.mxu0 0.0
    %182 = vmatmul.mubr.f32.gmra.mrb[0].mxu0 %v115
    %v183 = vpop.f32.mrb[0].mxu0
    %v184 = vadd.f32 0.0, %v183
    %v185 = vpop.f32.mrb[0].mxu0
    %186 = vdwg.mxu0
    %v187 = vmax.f32 %v184, 0.0
    %vm188 = vcmask 15360
    %v190 = vsel %vm188, %v102, 0
    %v193 = vsel %vm188, %v103, 0
    %v196 = vsel %vm188, %v104, 0
    %v199 = vsel %vm188, %v105, 0
    %vm201 = vcmask 1041408
    %v203 = vsel %vm201, %v187, 0
    %205 = vmatprep.subr.mxu0 0.0
    %206 = vmatpush1.msra.mxu0 %v203
    %207 = vmatprep.subr.mxu0 0.0
    %208 = vmatpush1.msra.mxu0 0.0
    %209 = vmatprep.subr.mxu0 0.0
    %210 = vmatpush1.msra.mxu0 0.0
    %211 = vmatprep.subr.mxu0 0.0
    %212 = vmatpush1.msra.mxu0 0.0
    %213 = vmatprep.subr.mxu0 0.0
    %214 = vmatpush1.msra.mxu0 0.0
    %215 = vmatprep.subr.mxu0 0.0
    %216 = vmatpush1.msra.mxu0 0.0
    %217 = vmatprep.subr.mxu0 0.0
    %218 = vmatpush1.msra.mxu0 0.0
    %219 = vmatprep.subr.mxu0 0.0
    %220 = vmatpush1.msra.mxu0 0.0
    %221 = vmatprep.subr.mxu0 0.0
    %222 = vmatpush1.msra.mxu0 0.0
    %223 = vmatprep.subr.mxu0 0.0
    %224 = vmatpush1.msra.mxu0 0.0
    %225 = vmatprep.subr.mxu0 0.0
    %226 = vmatpush1.msra.mxu0 0.0
    %227 = vmatprep.subr.mxu0 0.0
    %228 = vmatpush1.msra.mxu0 0.0
    %229 = vmatprep.subr.mxu0 0.0
    %230 = vmatpush1.msra.mxu0 0.0
    %231 = vmatprep.subr.mxu0 0.0
    %232 = vmatpush1.msra.mxu0 0.0
    %233 = vmatprep.subr.mxu0 0.0
    %234 = vmatpush1.msra.mxu0 0.0
    %235 = vmatprep.subr.mxu0 0.0
    %236 = vmatpush1.msra.mxu0 0.0
    %237 = vmatprep.subr.mxu0 0.0
    %238 = vmatpush1.msra.mxu0 0.0
    %239 = vmatprep.subr.mxu0 0.0
    %240 = vmatpush1.msra.mxu0 0.0
    %241 = vmatprep.subr.mxu0 0.0
    %242 = vmatpush1.msra.mxu0 0.0
    %243 = vmatprep.subr.mxu0 0.0
    %244 = vmatpush1.msra.mxu0 0.0
    %245 = vmatprep.subr.mxu0 0.0
    %246 = vmatpush1.msra.mxu0 0.0
    %247 = vmatprep.subr.mxu0 0.0
    %248 = vmatpush1.msra.mxu0 0.0
    %249 = vmatprep.subr.mxu0 0.0
    %250 = vmatpush1.msra.mxu0 0.0
    %251 = vmatprep.subr.mxu0 0.0
    %252 = vmatpush1.msra.mxu0 0.0
    %253 = vmatprep.subr.mxu0 0.0
    %254 = vmatpush1.msra.mxu0 0.0
    %255 = vmatprep.subr.mxu0 0.0
    %256 = vmatpush1.msra.mxu0 0.0
    %257 = vmatprep.subr.mxu0 0.0
    %258 = vmatpush1.msra.mxu0 0.0
    %259 = vmatprep.subr.mxu0 0.0
    %260 = vmatpush1.msra.mxu0 0.0
    %261 = vmatprep.subr.mxu0 0.0
    %262 = vmatpush1.msra.mxu0 0.0
    %263 = vmatprep.subr.mxu0 0.0
    %264 = vmatpush1.msra.mxu0 0.0
    %265 = vmatprep.subr.mxu0 0.0
    %266 = vmatpush1.msra.mxu0 0.0
    %267 = vmatprep.subr.mxu0 0.0
    %268 = vmatpush1.msra.mxu0 0.0
    %269 = vmatprep.mubr.f32.mxu0 0.0
    %270 = vmatmul.mubr.f32.gmra.mrb[0].mxu0 %v190
    %v271 = vpop.f32.mrb[0].mxu0
    %v272 = vadd.f32 0.0, %v271
    %v273 = vpop.f32.mrb[0].mxu0
    %274 = vmatprep.mubr.f32.mxu0 0.0
    %275 = vmatmul.mubr.f32.gmra.mrb[0].mxu0 %v193
    %v276 = vpop.f32.mrb[0].mxu0
    %v277 = vadd.f32 0.0, %v276
    %v278 = vpop.f32.mrb[0].mxu0
    %279 = vmatprep.mubr.f32.mxu0 0.0
    %280 = vmatmul.mubr.f32.gmra.mrb[0].mxu0 %v196
    %v281 = vpop.f32.mrb[0].mxu0
    %v282 = vadd.f32 0.0, %v281
    %v283 = vpop.f32.mrb[0].mxu0
    %284 = vmatprep.mubr.f32.mxu0 0.0
    %285 = vmatmul.mubr.f32.gmra.mrb[0].mxu0 %v199
    %v286 = vpop.f32.mrb[0].mxu0
    %v287 = vadd.f32 0.0, %v286
    %v288 = vpop.f32.mrb[0].mxu0
    %289 = vdwg.mxu0
    %294 = vrot.lane.b32.xlu0 %v272, 127
    %v295 = vpop.permute.xlu0 %294
    %296 = vrot.lane.b32.xlu0 %v277, 127
    %v297 = vpop.permute.xlu0 %296
    %298 = vrot.lane.b32.xlu0 %v282, 127
    %v299 = vpop.permute.xlu0 %298
    %300 = vrot.lane.b32.xlu0 %v287, 127
    %v301 = vpop.permute.xlu0 %300
    %v306 = vadd.f32 %v272, %v295
    %v307 = vadd.f32 %v277, %v297
    %v308 = vadd.f32 %v282, %v299
    %v309 = vadd.f32 %v287, %v301
    %v310 = vxor.u32 %v306, 2147483648
    %v311 = vxor.u32 %v307, 2147483648
    %v312 = vxor.u32 %v308, 2147483648
    %v313 = vxor.u32 %v309, 2147483648
    %v314 = vmul.f32 %v310, 1.442695
    %v315 = vpow.pop %v314
    %v316 = vmul.f32 %v311, 1.442695
    %v317 = vpow.pop %v316
    %v318 = vmul.f32 %v312, 1.442695
    %v319 = vpow.pop %v318
    %v320 = vmul.f32 %v313, 1.442695
    %v321 = vpow.pop %v320
    %v322 = vadd.f32 %v315, 1.0
    %v323 = vadd.f32 %v317, 1.0
    %v324 = vadd.f32 %v319, 1.0
    %v325 = vadd.f32 %v321, 1.0
    %v326 = vrcp.pop %v322
    %v327 = vmul.f32 1.0, %v326
    %v328 = vrcp.pop %v323
    %v329 = vmul.f32 1.0, %v328
    %v330 = vrcp.pop %v324
    %v331 = vmul.f32 1.0, %v330
    %v332 = vrcp.pop %v325
    %v333 = vmul.f32 1.0, %v332
    %vm334 = vcmask 7168
    %335 = vst.msk [vmem:[%s3] sm:$0xff] %vm334, %v327
    %336 = vst.msk [vmem:[%s3 + $0x8] sm:$0xff] %vm334, %v329
    %337 = vst.msk [vmem:[%s3 + $0x10] sm:$0xff] %vm334, %v331
    %338 = vst.msk [vmem:[%s3 + $0x18] sm:$0xff] %vm334, %v333
    %v339 = vsel %vm108, %v73, %v91
    %v340 = vsel %vm108, %v74, %v94
    %v341 = vsel %vm108, %v75, %v97
    %v342 = vsel %vm108, %v76, %v100
    %343 = vmatprep.subr.mxu0 0.0
    %344 = vmatpush1.msra.mxu0 %v339
    %345 = vmatprep.subr.mxu0 0.0
    %346 = vmatpush1.msra.mxu0 %v340
    %347 = vmatprep.subr.mxu0 0.0
    %348 = vmatpush1.msra.mxu0 %v341
    %349 = vmatprep.subr.mxu0 0.0
    %350 = vmatpush1.msra.mxu0 %v342
    %351 = vmatprep.subr.mxu0 0.0
    %352 = vmatpush1.msra.mxu0 0.0
    %353 = vmatprep.subr.mxu0 0.0
    %354 = vmatpush1.msra.mxu0 0.0
    %355 = vmatprep.subr.mxu0 0.0
    %356 = vmatpush1.msra.mxu0 0.0
    %357 = vmatprep.subr.mxu0 0.0
    %358 = vmatpush1.msra.mxu0 0.0
    %359 = vmatprep.subr.mxu0 0.0
    %360 = vmatpush1.msra.mxu0 0.0
    %361 = vmatprep.subr.mxu0 0.0
    %362 = vmatpush1.msra.mxu0 0.0
    %363 = vmatprep.subr.mxu0 0.0
    %364 = vmatpush1.msra.mxu0 0.0
    %365 = vmatprep.subr.mxu0 0.0
    %366 = vmatpush1.msra.mxu0 0.0
    %367 = vmatprep.subr.mxu0 0.0
    %368 = vmatpush1.msra.mxu0 0.0
    %369 = vmatprep.subr.mxu0 0.0
    %370 = vmatpush1.msra.mxu0 0.0
    %371 = vmatprep.subr.mxu0 0.0
    %372 = vmatpush1.msra.mxu0 0.0
    %373 = vmatprep.subr.mxu0 0.0
    %374 = vmatpush1.msra.mxu0 0.0
    %375 = vmatprep.subr.mxu0 0.0
    %376 = vmatpush1.msra.mxu0 0.0
    %377 = vmatprep.subr.mxu0 0.0
    %378 = vmatpush1.msra.mxu0 0.0
    %379 = vmatprep.subr.mxu0 0.0
    %380 = vmatpush1.msra.mxu0 0.0
    %381 = vmatprep.subr.mxu0 0.0
    %382 = vmatpush1.msra.mxu0 0.0
    %383 = vmatprep.subr.mxu0 0.0
    %384 = vmatpush1.msra.mxu0 0.0
    %385 = vmatprep.subr.mxu0 0.0
    %386 = vmatpush1.msra.mxu0 0.0
    %387 = vmatprep.subr.mxu0 0.0
    %388 = vmatpush1.msra.mxu0 0.0
    %389 = vmatprep.subr.mxu0 0.0
    %390 = vmatpush1.msra.mxu0 0.0
    %391 = vmatprep.subr.mxu0 0.0
    %392 = vmatpush1.msra.mxu0 0.0
    %393 = vmatprep.subr.mxu0 0.0
    %394 = vmatpush1.msra.mxu0 0.0
    %395 = vmatprep.subr.mxu0 0.0
    %396 = vmatpush1.msra.mxu0 0.0
    %397 = vmatprep.subr.mxu0 0.0
    %398 = vmatpush1.msra.mxu0 0.0
    %399 = vmatprep.subr.mxu0 0.0
    %400 = vmatpush1.msra.mxu0 0.0
    %401 = vmatprep.subr.mxu0 0.0
    %402 = vmatpush1.msra.mxu0 0.0
    %403 = vmatprep.subr.mxu0 0.0
    %404 = vmatpush1.msra.mxu0 0.0
    %405 = vmatprep.subr.mxu0 0.0
    %406 = vmatpush1.msra.mxu0 0.0
    %407 = vmatprep.mubr.f32.mxu0 0.0
    %408 = vmatmul.mubr.f32.gmra.mrb[0].mxu0 %v115
    %v409 = vpop.f32.mrb[0].mxu0
    %v410 = vadd.f32 0.0, %v409
    %v411 = vpop.f32.mrb[0].mxu0
    %412 = vdwg.mxu0
    %v413 = vmax.f32 %v410, 0.0
    %v415 = vsel %vm201, %v413, 0
    %417 = vmatprep.subr.mxu0 0.0
    %418 = vmatpush1.msra.mxu0 %v415
    %419 = vmatprep.subr.mxu0 0.0
    %420 = vmatpush1.msra.mxu0 0.0
    %421 = vmatprep.subr.mxu0 0.0
    %422 = vmatpush1.msra.mxu0 0.0
    %423 = vmatprep.subr.mxu0 0.0
    %424 = vmatpush1.msra.mxu0 0.0
    %425 = vmatprep.subr.mxu0 0.0
    %426 = vmatpush1.msra.mxu0 0.0
    %427 = vmatprep.subr.mxu0 0.0
    %428 = vmatpush1.msra.mxu0 0.0
    %429 = vmatprep.subr.mxu0 0.0
    %430 = vmatpush1.msra.mxu0 0.0
    %431 = vmatprep.subr.mxu0 0.0
    %432 = vmatpush1.msra.mxu0 0.0
    %433 = vmatprep.subr.mxu0 0.0
    %434 = vmatpush1.msra.mxu0 0.0
    %435 = vmatprep.subr.mxu0 0.0
    %436 = vmatpush1.msra.mxu0 0.0
    %437 = vmatprep.subr.mxu0 0.0
    %438 = vmatpush1.msra.mxu0 0.0
    %439 = vmatprep.subr.mxu0 0.0
    %440 = vmatpush1.msra.mxu0 0.0
    %441 = vmatprep.subr.mxu0 0.0
    %442 = vmatpush1.msra.mxu0 0.0
    %443 = vmatprep.subr.mxu0 0.0
    %444 = vmatpush1.msra.mxu0 0.0
    %445 = vmatprep.subr.mxu0 0.0
    %446 = vmatpush1.msra.mxu0 0.0
    %447 = vmatprep.subr.mxu0 0.0
    %448 = vmatpush1.msra.mxu0 0.0
    %449 = vmatprep.subr.mxu0 0.0
    %450 = vmatpush1.msra.mxu0 0.0
    %451 = vmatprep.subr.mxu0 0.0
    %452 = vmatpush1.msra.mxu0 0.0
    %453 = vmatprep.subr.mxu0 0.0
    %454 = vmatpush1.msra.mxu0 0.0
    %455 = vmatprep.subr.mxu0 0.0
    %456 = vmatpush1.msra.mxu0 0.0
    %457 = vmatprep.subr.mxu0 0.0
    %458 = vmatpush1.msra.mxu0 0.0
    %459 = vmatprep.subr.mxu0 0.0
    %460 = vmatpush1.msra.mxu0 0.0
    %461 = vmatprep.subr.mxu0 0.0
    %462 = vmatpush1.msra.mxu0 0.0
    %463 = vmatprep.subr.mxu0 0.0
    %464 = vmatpush1.msra.mxu0 0.0
    %465 = vmatprep.subr.mxu0 0.0
    %466 = vmatpush1.msra.mxu0 0.0
    %467 = vmatprep.subr.mxu0 0.0
    %468 = vmatpush1.msra.mxu0 0.0
    %469 = vmatprep.subr.mxu0 0.0
    %470 = vmatpush1.msra.mxu0 0.0
    %471 = vmatprep.subr.mxu0 0.0
    %472 = vmatpush1.msra.mxu0 0.0
    %473 = vmatprep.subr.mxu0 0.0
    %474 = vmatpush1.msra.mxu0 0.0
    %475 = vmatprep.subr.mxu0 0.0
    %476 = vmatpush1.msra.mxu0 0.0
    %477 = vmatprep.subr.mxu0 0.0
    %478 = vmatpush1.msra.mxu0 0.0
    %479 = vmatprep.subr.mxu0 0.0
    %480 = vmatpush1.msra.mxu0 0.0
    %481 = vmatprep.mubr.f32.mxu0 0.0
    %482 = vmatmul.mubr.f32.gmra.mrb[0].mxu0 %v190
    %v483 = vpop.f32.mrb[0].mxu0
    %v484 = vadd.f32 0.0, %v483
    %v485 = vpop.f32.mrb[0].mxu0
    %486 = vmatprep.mubr.f32.mxu0 0.0
    %487 = vmatmul.mubr.f32.gmra.mrb[0].mxu0 %v193
    %v488 = vpop.f32.mrb[0].mxu0
    %v489 = vadd.f32 0.0, %v488
    %v490 = vpop.f32.mrb[0].mxu0
    %491 = vmatprep.mubr.f32.mxu0 0.0
    %492 = vmatmul.mubr.f32.gmra.mrb[0].mxu0 %v196
    %v493 = vpop.f32.mrb[0].mxu0
    %v494 = vadd.f32 0.0, %v493
    %v495 = vpop.f32.mrb[0].mxu0
    %496 = vmatprep.mubr.f32.mxu0 0.0
    %497 = vmatmul.mubr.f32.gmra.mrb[0].mxu0 %v199
    %v498 = vpop.f32.mrb[0].mxu0
    %v499 = vadd.f32 0.0, %v498
    %v500 = vpop.f32.mrb[0].mxu0
    %501 = vdwg.mxu0
    %506 = vrot.lane.b32.xlu0 %v484, 127
    %v507 = vpop.permute.xlu0 %506
    %508 = vrot.lane.b32.xlu0 %v489, 127
    %v509 = vpop.permute.xlu0 %508
    %510 = vrot.lane.b32.xlu0 %v494, 127
    %v511 = vpop.permute.xlu0 %510
    %512 = vrot.lane.b32.xlu0 %v499, 127
    %v513 = vpop.permute.xlu0 %512
    %v518 = vadd.f32 %v484, %v507
    %v519 = vadd.f32 %v489, %v509
    %v520 = vadd.f32 %v494, %v511
    %v521 = vadd.f32 %v499, %v513
    %v522 = vxor.u32 %v518, 2147483648
    %v523 = vxor.u32 %v519, 2147483648
    %v524 = vxor.u32 %v520, 2147483648
    %v525 = vxor.u32 %v521, 2147483648
    %v526 = vmul.f32 %v522, 1.442695
    %v527 = vpow.pop %v526
    %v528 = vmul.f32 %v523, 1.442695
    %v529 = vpow.pop %v528
    %v530 = vmul.f32 %v524, 1.442695
    %v531 = vpow.pop %v530
    %v532 = vmul.f32 %v525, 1.442695
    %v533 = vpow.pop %v532
    %v534 = vadd.f32 %v527, 1.0
    %v535 = vadd.f32 %v529, 1.0
    %v536 = vadd.f32 %v531, 1.0
    %v537 = vadd.f32 %v533, 1.0
    %v538 = vrcp.pop %v534
    %v539 = vmul.f32 1.0, %v538
    %v540 = vrcp.pop %v535
    %v541 = vmul.f32 1.0, %v540
    %v542 = vrcp.pop %v536
    %v543 = vmul.f32 1.0, %v542
    %v544 = vrcp.pop %v537
    %v545 = vmul.f32 1.0, %v544
    %s546 = scalar_lea.vmem %s3, 32
    %547 = vst.msk [vmem:[%s546] sm:$0xff] %vm334, %v539
    %548 = vst.msk [vmem:[%s546 + $0x8] sm:$0xff] %vm334, %v541
    %549 = vst.msk [vmem:[%s546 + $0x10] sm:$0xff] %vm334, %v543
    %550 = vst.msk [vmem:[%s546 + $0x18] sm:$0xff] %vm334, %v545
    // Predicated region
    $region18: #{tpu_custom_call.1} parent=1 // pred_check
      _
    $region19: #{tpu_custom_call.1} parent=1 // pred_check_branch
      %552 = sbr.rel (0) target = $region21
    $region20: #{tpu_custom_call.1} parent=1 // pred_region
      _
    $region21: #{tpu_custom_call.1} parent=1 // pred_fallthru
      _
    // Predicated region
    $region22: #{tpu_custom_call.1} parent=1 // pred_check
      _
    $region23: #{tpu_custom_call.1} parent=1 // pred_check_branch
      %554 = sbr.rel (0) target = $region25
    $region24: #{tpu_custom_call.1} parent=1 // pred_region
      _
    $region25: #{tpu_custom_call.1} parent=1 // pred_fallthru
      _
    %555 = vsyncpa [#allocation3], 1

</llo_original>
